<compile_context>
chip_gen: v5e
topology: v5e:2x2
jax: 0.10.0
libtpu: 0.0.40
codegen_flags: <defaults>
</compile_context>

<pallas_src>
import jax
import jax.numpy as jnp
from jax.experimental import pallas as pl
from jax.experimental.pallas import tpu as pltpu

FEAT = 128  # per-branch feature width; concat width = 256 -> nn.Linear(256, 1)


def ensemble_kernel(x1_ref, x2_ref, wa_ref, ba_ref, wb_ref, bb_ref,
                    wca_ref, wcb_ref, bc_ref, out_ref):
    """One batch tile of the full ensemble forward.

    Pooling is pre-folded into the branch weights, so each branch is a single
    lane-dense MXU matmul (bf16 operands, f32 accumulation).  The concat +
    Linear(256,1) head is a split classifier:
        relu(fa) * wc[:128] + relu(fb) * wc[128:]  summed over lanes + bc.
    """
    # f32 HBM tiles -> bf16 MXU operands (cast is VPU work, hidden under DMA).
    x1 = x1_ref[...].astype(jnp.bfloat16)
    x2 = x2_ref[...].astype(jnp.bfloat16)

    fa = jnp.dot(x1, wa_ref[...],
                 preferred_element_type=jnp.float32) + ba_ref[...]     # [TB, 128]
    fb = jnp.dot(x2, wb_ref[...],
                 preferred_element_type=jnp.float32) + bb_ref[...]     # [TB, 128]

    ha = jnp.maximum(fa, 0.0)            # F.relu on the branch-A half of the concat
    hb = jnp.maximum(fb, 0.0)            # F.relu on the branch-B half of the concat

    # classifier: relu(cat(fa, fb)) @ wc + bc == ha@wc[:128] + hb@wc[128:] + bc
    contrib = ha * wca_ref[...] + hb * wcb_ref[...]                     # VPU, [TB, 128]
    out = jnp.sum(contrib, axis=-1, keepdims=True) + bc_ref[0]          # XLU -> [TB, 1]

    # Lane-dense store: broadcast the width-1 result across a 128-lane slab
    # (unmasked full-width vst); the wrapper slices column 0.
    out_ref[...] = jnp.broadcast_to(out, out_ref.shape).astype(out_ref.dtype)


def ensemble_forward(x1, x2, params, *, mxu_dtype=jnp.bfloat16):
    wa, ba, wb, bb, wc, bc = params
    B, C, H, W = x1.shape
    _, S, D = x2.shape
    K1 = C * H * W
    K2 = S * D

    # ---- layout / weight prep (small one-time XLA ops outside the kernel) ----
    # Input reshapes are contiguous (metadata-only); NO dtype cast here — the
    # cast happens in-kernel to avoid an extra HBM round trip on the inputs.
    x1_flat = x1.reshape(B, K1)                                          # f32, lane-dense
    x2_flat = x2.reshape(B, K2)                                          # f32, lane-dense
    # Fold global-average-pool (H*W) / sequence mean-pool (S) into the weights.
    wa_exp = (jnp.repeat(wa, H * W, axis=0) / float(H * W)).astype(mxu_dtype)  # [K1,128]
    wb_exp = (jnp.tile(wb, (S, 1)) / float(S)).astype(mxu_dtype)               # [K2,128]
    ba_f = ba.reshape(1, FEAT).astype(jnp.float32)
    bb_f = bb.reshape(1, FEAT).astype(jnp.float32)
    # Split the Linear(256, 1) classifier so no concat is needed in-kernel.
    wc_a = wc[:FEAT, 0].reshape(1, FEAT).astype(jnp.float32)
    wc_b = wc[FEAT:, 0].reshape(1, FEAT).astype(jnp.float32)
    bc_s = bc.reshape(1).astype(jnp.float32)

    # ---- batch tiling ---------------------------------------------------------
    if B <= 256:
        TB, B_pad = B, B                 # single tile: block dim == full array dim
    else:
        TB = 256                         # sublane-aligned tile (multiple of 8)
        B_pad = -(-B // TB) * TB
    if B_pad != B:
        pad = B_pad - B
        x1_flat = jnp.pad(x1_flat, ((0, pad), (0, 0)))
        x2_flat = jnp.pad(x2_flat, ((0, pad), (0, 0)))
    grid = (B_pad // TB,)

    # VMEM budget: resident bf16 weights + double-buffered f32 input tiles +
    # double-buffered f32 output slab + headroom for biases / temporaries.
    w_bytes = jnp.dtype(mxu_dtype).itemsize
    vmem_needed = ((K1 + K2) * FEAT * w_bytes           # resident branch weights
                   + 2 * 2 * TB * (K1 + K2) * 4         # double-buffered f32 input tiles
                   + 2 * TB * 128 * 4                   # double-buffered output slab
                   + (1 << 20))                         # headroom
    vmem_limit = min(int(1.5 * vmem_needed), 48 * 1024 * 1024)  # fits v7x's 64 MiB

    out_padded = pl.pallas_call(
        ensemble_kernel,
        out_shape=jax.ShapeDtypeStruct((B_pad, 128), jnp.float32),
        grid=grid,
        in_specs=[
            pl.BlockSpec((TB, K1), lambda i: (i, 0)),            # x1 batch tile (f32)
            pl.BlockSpec((TB, K2), lambda i: (i, 0)),            # x2 batch tile (f32)
            pl.BlockSpec((K1, FEAT), lambda i: (0, 0)),          # wa_exp (VMEM-resident)
            pl.BlockSpec((1, FEAT), lambda i: (0, 0)),           # ba
            pl.BlockSpec((K2, FEAT), lambda i: (0, 0)),          # wb_exp (VMEM-resident)
            pl.BlockSpec((1, FEAT), lambda i: (0, 0)),           # bb
            pl.BlockSpec((1, FEAT), lambda i: (0, 0)),           # wc[:128]
            pl.BlockSpec((1, FEAT), lambda i: (0, 0)),           # wc[128:]
            pl.BlockSpec(memory_space=pltpu.MemorySpace.SMEM),   # bc scalar
        ],
        out_specs=pl.BlockSpec((TB, 128), lambda i: (i, 0)),
        compiler_params=pltpu.CompilerParams(
            dimension_semantics=("parallel",),   # batch tiles shard across TCs on v7x
            vmem_limit_bytes=vmem_limit,
        ),
    )(x1_flat, x2_flat, wa_exp, ba_f, wb_exp, bb_f, wc_a, wc_b, bc_s)

    return out_padded[:B, :1]


def reference_forward(x1, x2, params):
    """Pure-JAX f32 reference in the original (pool -> linear) formulation."""
    wa, ba, wb, bb, wc, bc = params
    fa = jnp.mean(x1, axis=(2, 3)) @ wa + ba
    fb = jnp.mean(x2, axis=1) @ wb + bb
    x = jnp.concatenate([fa, fb], axis=1)
    x = jnp.maximum(x, 0.0)
    return x @ wc + bc


if __name__ == "__main__":
    # Small shapes consistent with the forward: batch=2, image [4,16,16], seq=8, hidden=32.
    B, C, H, W = 2, 4, 16, 16
    S, D = 8, 32

    key = jax.random.PRNGKey(0)
    k1, k2, k3, k4, k5, k6, k7, k8 = jax.random.split(key, 8)

    x1 = jax.random.normal(k1, (B, C, H, W), dtype=jnp.float32)
    x2 = jax.random.normal(k2, (B, S, D), dtype=jnp.float32)

    # Deterministic synthetic parameters (shapes implied by the forward pass).
    wa = jax.random.normal(k3, (C, FEAT), dtype=jnp.float32) * 0.1
    ba = jax.random.normal(k4, (1, FEAT), dtype=jnp.float32) * 0.1
    wb = jax.random.normal(k5, (D, FEAT), dtype=jnp.float32) * 0.1
    bb = jax.random.normal(k6, (1, FEAT), dtype=jnp.float32) * 0.1
    # classifier = nn.Linear(256, 1)
    wc = jax.random.normal(k7, (2 * FEAT, 1), dtype=jnp.float32) * 0.1
    bc = jax.random.normal(k8, (1, 1), dtype=jnp.float32) * 0.1

    params = (wa, ba, wb, bb, wc, bc)

    out = jax.block_until_ready(ensemble_forward(x1, x2, params))
    ref = reference_forward(x1, x2, params)

    assert out.shape == (B, 1), out.shape
    # bf16 MXU operands with f32 accumulation vs. the f32 reference -> loose tolerance.
    assert jnp.allclose(out, ref, atol=2e-2, rtol=2e-2), (out, ref)

    # TODO(synk): full ResNet / RoBERTa backbones are injected modules with no
    # in-script definition; they are replaced by pool+linear stand-ins above.
    print("KERNEL_OK")
</pallas_src>

<mosaic_0001>
module attributes {stable_mosaic.version = 11 : i64} {
  func.func @ensemble_kernel(%arg0: i32, %arg1: memref<2x1024xf32, #tpu.memory_space<vmem>>, %arg2: memref<2x256xf32, #tpu.memory_space<vmem>>, %arg3: memref<1024x128xbf16, #tpu.memory_space<vmem>>, %arg4: memref<1x128xf32, #tpu.memory_space<vmem>>, %arg5: memref<256x128xbf16, #tpu.memory_space<vmem>>, %arg6: memref<1x128xf32, #tpu.memory_space<vmem>>, %arg7: memref<1x128xf32, #tpu.memory_space<vmem>>, %arg8: memref<1x128xf32, #tpu.memory_space<vmem>>, %arg9: memref<1xf32, #tpu.memory_space<smem>>, %arg10: memref<2x128xf32, #tpu.memory_space<vmem>>) attributes {dimension_semantics = [#tpu.dimension_semantics<parallel>], iteration_bounds = array<i64: 1>, scalar_prefetch = 0 : i64, scratch_operands = 0 : i64, tpu.core_type = #tpu.core_type<tc>, window_params = [{transform_indices = @transform_0, window_bounds = array<i64: 2, 1024>}, {transform_indices = @transform_1, window_bounds = array<i64: 2, 256>}, {pipeline_mode = #tpu.pipeline_mode<synchronous>, transform_indices = @transform_2, window_bounds = array<i64: 1024, 128>}, {pipeline_mode = #tpu.pipeline_mode<synchronous>, transform_indices = @transform_3, window_bounds = array<i64: 1, 128>}, {pipeline_mode = #tpu.pipeline_mode<synchronous>, transform_indices = @transform_4, window_bounds = array<i64: 256, 128>}, {pipeline_mode = #tpu.pipeline_mode<synchronous>, transform_indices = @transform_5, window_bounds = array<i64: 1, 128>}, {pipeline_mode = #tpu.pipeline_mode<synchronous>, transform_indices = @transform_6, window_bounds = array<i64: 1, 128>}, {pipeline_mode = #tpu.pipeline_mode<synchronous>, transform_indices = @transform_7, window_bounds = array<i64: 1, 128>}, {transform_indices = @transform_8, window_bounds = array<i64: 1>}, {transform_indices = @transform_9, window_bounds = array<i64: 2, 128>}]} {
    %c0 = arith.constant 0 : index
    %c0_0 = arith.constant 0 : index
    %0 = vector.load %arg1[%c0, %c0_0] : memref<2x1024xf32, #tpu.memory_space<vmem>>, vector<2x1024xf32>
    %1 = arith.truncf %0 : vector<2x1024xf32> to vector<2x1024xbf16>
    %c0_1 = arith.constant 0 : index
    %c0_2 = arith.constant 0 : index
    %2 = vector.load %arg2[%c0_1, %c0_2] : memref<2x256xf32, #tpu.memory_space<vmem>>, vector<2x256xf32>
    %3 = arith.truncf %2 : vector<2x256xf32> to vector<2x256xbf16>
    %c0_3 = arith.constant 0 : index
    %c0_4 = arith.constant 0 : index
    %4 = vector.load %arg3[%c0_3, %c0_4] : memref<1024x128xbf16, #tpu.memory_space<vmem>>, vector<1024x128xbf16>
    %cst = arith.constant dense<0.000000e+00> : vector<2x128xf32>
    %5 = tpu.matmul %1, %4, %cst {dimension_numbers = #tpu.dot_dimension_numbers<[1], [0], [0], [1], [0, 0, 1, 1], [], []>} : vector<2x1024xbf16>, vector<1024x128xbf16>, vector<2x128xf32> -> vector<2x128xf32>
    %c0_5 = arith.constant 0 : index
    %c0_6 = arith.constant 0 : index
    %6 = vector.load %arg4[%c0_5, %c0_6] : memref<1x128xf32, #tpu.memory_space<vmem>>, vector<1x128xf32>
    %7 = vector.broadcast %6 : vector<1x128xf32> to vector<2x128xf32>
    %8 = arith.addf %5, %7 : vector<2x128xf32>
    %c0_7 = arith.constant 0 : index
    %c0_8 = arith.constant 0 : index
    %9 = vector.load %arg5[%c0_7, %c0_8] : memref<256x128xbf16, #tpu.memory_space<vmem>>, vector<256x128xbf16>
    %cst_9 = arith.constant dense<0.000000e+00> : vector<2x128xf32>
    %10 = tpu.matmul %3, %9, %cst_9 {dimension_numbers = #tpu.dot_dimension_numbers<[1], [0], [0], [1], [0, 0, 1, 1], [], []>} : vector<2x256xbf16>, vector<256x128xbf16>, vector<2x128xf32> -> vector<2x128xf32>
    %c0_10 = arith.constant 0 : index
    %c0_11 = arith.constant 0 : index
    %11 = vector.load %arg6[%c0_10, %c0_11] : memref<1x128xf32, #tpu.memory_space<vmem>>, vector<1x128xf32>
    %12 = vector.broadcast %11 : vector<1x128xf32> to vector<2x128xf32>
    %13 = arith.addf %10, %12 : vector<2x128xf32>
    %cst_12 = arith.constant 0.000000e+00 : f32
    %14 = vector.broadcast %cst_12 : f32 to vector<2x128xf32>
    %15 = arith.maximumf %8, %14 : vector<2x128xf32>
    %cst_13 = arith.constant 0.000000e+00 : f32
    %16 = vector.broadcast %cst_13 : f32 to vector<2x128xf32>
    %17 = arith.maximumf %13, %16 : vector<2x128xf32>
    %c0_14 = arith.constant 0 : index
    %c0_15 = arith.constant 0 : index
    %18 = vector.load %arg7[%c0_14, %c0_15] : memref<1x128xf32, #tpu.memory_space<vmem>>, vector<1x128xf32>
    %19 = vector.broadcast %18 : vector<1x128xf32> to vector<2x128xf32>
    %20 = arith.mulf %15, %19 : vector<2x128xf32>
    %c0_16 = arith.constant 0 : index
    %c0_17 = arith.constant 0 : index
    %21 = vector.load %arg8[%c0_16, %c0_17] : memref<1x128xf32, #tpu.memory_space<vmem>>, vector<1x128xf32>
    %22 = vector.broadcast %21 : vector<1x128xf32> to vector<2x128xf32>
    %23 = arith.mulf %17, %22 : vector<2x128xf32>
    %24 = arith.addf %20, %23 : vector<2x128xf32>
    %cst_18 = arith.constant dense<0.000000e+00> : vector<2xf32>
    %25 = vector.multi_reduction <add>, %24, %cst_18 [1] : vector<2x128xf32> to vector<2xf32>
    %26 = vector.shape_cast %25 : vector<2xf32> to vector<2x1xf32>
    %c0_19 = arith.constant 0 : index
    %27 = memref.load %arg9[%c0_19] : memref<1xf32, #tpu.memory_space<smem>>
    %28 = vector.broadcast %27 : f32 to vector<2x1xf32>
    %29 = arith.addf %26, %28 : vector<2x1xf32>
    %30 = vector.shape_cast %29 : vector<2x1xf32> to vector<2x1xf32>
    %31 = vector.broadcast %30 : vector<2x1xf32> to vector<2x128xf32>
    %c0_20 = arith.constant 0 : index
    %c0_21 = arith.constant 0 : index
    %32 = vector.load %arg10[%c0_20, %c0_21] : memref<2x128xf32, #tpu.memory_space<vmem>>, vector<2x128xf32>
    tpu.vector_store %arg10[%c0_20, %c0_21], %31 {strides = array<i32>} : memref<2x128xf32, #tpu.memory_space<vmem>>, vector<2x128xf32>,
    return
  }
  func.func @transform_0(%arg0: i32) -> (i32, i32) {
    %c0_i32 = arith.constant 0 : i32
    %c0_i32_0 = arith.constant 0 : i32
    return %arg0, %c0_i32 : i32, i32
  }
  func.func @transform_1(%arg0: i32) -> (i32, i32) {
    %c0_i32 = arith.constant 0 : i32
    %c0_i32_0 = arith.constant 0 : i32
    return %arg0, %c0_i32 : i32, i32
  }
  func.func @transform_2(%arg0: i32) -> (i32, i32) {
    %c0_i32 = arith.constant 0 : i32
    %c0_i32_0 = arith.constant 0 : i32
    %c0_i32_1 = arith.constant 0 : i32
    return %c0_i32, %c0_i32_0 : i32, i32
  }
  func.func @transform_3(%arg0: i32) -> (i32, i32) {
    %c0_i32 = arith.constant 0 : i32
    %c0_i32_0 = arith.constant 0 : i32
    %c0_i32_1 = arith.constant 0 : i32
    return %c0_i32, %c0_i32_0 : i32, i32
  }
  func.func @transform_4(%arg0: i32) -> (i32, i32) {
    %c0_i32 = arith.constant 0 : i32
    %c0_i32_0 = arith.constant 0 : i32
    %c0_i32_1 = arith.constant 0 : i32
    return %c0_i32, %c0_i32_0 : i32, i32
  }
  func.func @transform_5(%arg0: i32) -> (i32, i32) {
    %c0_i32 = arith.constant 0 : i32
    %c0_i32_0 = arith.constant 0 : i32
    %c0_i32_1 = arith.constant 0 : i32
    return %c0_i32, %c0_i32_0 : i32, i32
  }
  func.func @transform_6(%arg0: i32) -> (i32, i32) {
    %c0_i32 = arith.constant 0 : i32
    %c0_i32_0 = arith.constant 0 : i32
    %c0_i32_1 = arith.constant 0 : i32
    return %c0_i32, %c0_i32_0 : i32, i32
  }
  func.func @transform_7(%arg0: i32) -> (i32, i32) {
    %c0_i32 = arith.constant 0 : i32
    %c0_i32_0 = arith.constant 0 : i32
    %c0_i32_1 = arith.constant 0 : i32
    return %c0_i32, %c0_i32_0 : i32, i32
  }
  func.func @transform_8(%arg0: i32) -> i32 {
    %c0_i32 = arith.constant 0 : i32
    %c0_i32_0 = arith.constant 0 : i32
    return %c0_i32 : i32
  }
  func.func @transform_9(%arg0: i32) -> (i32, i32) {
    %c0_i32 = arith.constant 0 : i32
    %c0_i32_0 = arith.constant 0 : i32
    return %arg0, %c0_i32 : i32, i32
  }
}

</mosaic_0001>

<llo_original>
// kernel: tpu_custom_call.1
$region0: #{tpu_custom_call.1}
  #allocation0 [shape = 'u32[]', space=smem, size = 0x4, offset = 0x4, fixed_abs, tag = 'smem constant byte address 0x4 - core index']
  #allocation1 [shape = 'u32[72,128]{1,0:T(1,128)}', space=vmem, size = 0x9000, scoped, tag = 'internal scratch']
  #allocation2 [shape = 'f32[1]{0:T(128)S(6)}', space=smem, size = 0x200, scoped, tag = 'scoped memory for tpu_custom_call.1']
  %s0 = inlined_call_operand.hbm [shape: f32[2,1024], index: 0, kind: input, shape index: {}]
  %s1 = inlined_call_operand.hbm [shape: f32[2,256], index: 1, kind: input, shape index: {}]
  %s2 = inlined_call_operand.hbm [shape: bf16[1024,128], index: 2, kind: input, shape index: {}]
  %s3 = inlined_call_operand.vmem [shape: f32[1,128], index: 3, kind: input, shape index: {}]
  %s4 = inlined_call_operand.hbm [shape: bf16[256,128], index: 4, kind: input, shape index: {}]
  %s5 = inlined_call_operand.vmem [shape: f32[1,128], index: 5, kind: input, shape index: {}]
  %s6 = inlined_call_operand.vmem [shape: f32[1,128], index: 6, kind: input, shape index: {}]
  %s7 = inlined_call_operand.vmem [shape: f32[1,128], index: 7, kind: input, shape index: {}]
  %s8 = inlined_call_operand.<no memory space> [shape: f32[1], index: 8, kind: input, shape index: {}]
  %s9 = inlined_call_operand.hbm [shape: f32[2,128], index: 9, kind: output, shape index: {}]
  %s10 = sld [smem:[#allocation0]]
  $region62: #{tpu_custom_call.1} parent=0
    _
  %s12 = ssub.s32 1, %s10
  %s13 = scalar_select 0, %s12, %s10
  %14 = sst [smem:[#allocation2]] %s8
  $region1: #{tpu_custom_call.1} parent=0
    #allocation3 [shape = 'u8[8192]{0}', space=vmem, size = 0x2000, scoped, tag = 'input window, operand 0, single buffered']
    #allocation4 [shape = 's32[1]{0}', space=sflag, size = 0x4, scoped, tag = 'scoped memory for tpu_custom_call.1']
    #allocation5 [shape = 's32[1]{0}', space=sflag, size = 0x4, scoped, tag = 'scoped memory for tpu_custom_call.1']
    #allocation6 [shape = 'u8[2048]{0}', space=vmem, size = 0x800, scoped, tag = 'input window, operand 1, single buffered']
    #allocation7 [shape = 's32[1]{0}', space=sflag, size = 0x4, scoped, tag = 'scoped memory for tpu_custom_call.1']
    #allocation8 [shape = 'u8[262144]{0}', space=vmem, size = 0x40000, scoped, tag = 'input window, operand 2, single buffered']
    #allocation9 [shape = 'u8[65536]{0}', space=vmem, size = 0x10000, scoped, tag = 'input window, operand 4, single buffered']
    #allocation10 [shape = 's32[1]{0}', space=sflag, size = 0x4, scoped, tag = 'scoped memory for tpu_custom_call.1']
    #allocation11 [shape = 'u8[1024]{0}', space=vmem, size = 0x400, scoped, tag = 'output window, operand 0, single buffered']
    %15 = vsyncpa [#allocation4], 0
    %16 = vsyncpa [#allocation7], 0
    %17 = vsyncpa [#allocation10], 0
    %18 = vsyncpa [#allocation5], 0
    // Predicated region
    $region2: #{tpu_custom_call.1} parent=1 // pred_check
      _
    $region3: #{tpu_custom_call.1} parent=1 // pred_check_branch
      %20 = sbr.rel (0) target = $region5
    $region4: #{tpu_custom_call.1} parent=1 // pred_region
      %22 = vsyncadd [#allocation4], 0
      %s24 = sshll.u32 %s0, 4
      %s25 = int_to_ptr.hbm [resolvable:$true] %s24
      %s26 = sshll.u32 [#allocation3], 4
      %s27 = int_to_ptr.vmem [resolvable:$true] %s26
      %29 = dma.hbm_to_vmem [thread:$0]  %s25, 256, %s27, [#allocation4]
    $region5: #{tpu_custom_call.1} parent=1 // pred_fallthru
      _
    // Predicated region
    $region6: #{tpu_custom_call.1} parent=1 // pred_check
      _
    $region7: #{tpu_custom_call.1} parent=1 // pred_check_branch
      %31 = sbr.rel (0) target = $region9
    $region8: #{tpu_custom_call.1} parent=1 // pred_region
      %33 = vsyncadd [#allocation7], 0
      %s35 = sshll.u32 %s1, 4
      %s36 = int_to_ptr.hbm [resolvable:$true] %s35
      %s37 = sshll.u32 [#allocation6], 4
      %s38 = int_to_ptr.vmem [resolvable:$true] %s37
      %40 = dma.hbm_to_vmem [thread:$0]  %s36, 64, %s38, [#allocation7]
    $region9: #{tpu_custom_call.1} parent=1 // pred_fallthru
      _
    // Predicated region
    $region10: #{tpu_custom_call.1} parent=1 // pred_check
      _
    $region11: #{tpu_custom_call.1} parent=1 // pred_check_branch
      %42 = sbr.rel (0) target = $region13
    $region12: #{tpu_custom_call.1} parent=1 // pred_region
      %44 = vsyncadd [#allocation7], 0
      %s45 = sshll.u32 %s2, 4
      %s46 = int_to_ptr.hbm [resolvable:$true] %s45
      %s47 = sshll.u32 [#allocation8], 4
      %s48 = int_to_ptr.vmem [resolvable:$true] %s47
      %53 = dma.hbm_to_vmem [thread:$0]  %s46, 8192, %s48, [#allocation7], 64, 64, 4
    $region13: #{tpu_custom_call.1} parent=1 // pred_fallthru
      _
    // Predicated region
    $region14: #{tpu_custom_call.1} parent=1 // pred_check
      _
    $region15: #{tpu_custom_call.1} parent=1 // pred_check_branch
      %55 = sbr.rel (0) target = $region17
    $region16: #{tpu_custom_call.1} parent=1 // pred_region
      _
    $region17: #{tpu_custom_call.1} parent=1 // pred_fallthru
      _
    // Predicated region
    $region18: #{tpu_custom_call.1} parent=1 // pred_check
      _
    $region19: #{tpu_custom_call.1} parent=1 // pred_check_branch
      %57 = sbr.rel (0) target = $region21
    $region20: #{tpu_custom_call.1} parent=1 // pred_region
      %59 = vsyncadd [#allocation10], 0
      %s60 = sshll.u32 %s4, 4
      %s61 = int_to_ptr.hbm [resolvable:$true] %s60
      %s62 = sshll.u32 [#allocation9], 4
      %s63 = int_to_ptr.vmem [resolvable:$true] %s62
      %68 = dma.hbm_to_vmem [thread:$0]  %s61, 2048, %s63, [#allocation10], 64, 64, 4
    $region21: #{tpu_custom_call.1} parent=1 // pred_fallthru
      _
    // Predicated region
    $region22: #{tpu_custom_call.1} parent=1 // pred_check
      _
    $region23: #{tpu_custom_call.1} parent=1 // pred_check_branch
      %70 = sbr.rel (0) target = $region25
    $region24: #{tpu_custom_call.1} parent=1 // pred_region
      _
    $region25: #{tpu_custom_call.1} parent=1 // pred_fallthru
      _
    // Predicated region
    $region26: #{tpu_custom_call.1} parent=1 // pred_check
      _
    $region27: #{tpu_custom_call.1} parent=1 // pred_check_branch
      %72 = sbr.rel (0) target = $region29
    $region28: #{tpu_custom_call.1} parent=1 // pred_region
      _
    $region29: #{tpu_custom_call.1} parent=1 // pred_fallthru
      _
    // Predicated region
    $region30: #{tpu_custom_call.1} parent=1 // pred_check
      _
    $region31: #{tpu_custom_call.1} parent=1 // pred_check_branch
      %74 = sbr.rel (0) target = $region33
    $region32: #{tpu_custom_call.1} parent=1 // pred_region
      _
    $region33: #{tpu_custom_call.1} parent=1 // pred_fallthru
      _
    // Predicated region
    $region34: #{tpu_custom_call.1} parent=1 // pred_check
      _
    $region35: #{tpu_custom_call.1} parent=1 // pred_check_branch
      %76 = sbr.rel (0) target = $region37
    $region36: #{tpu_custom_call.1} parent=1 // pred_region
      _
    $region37: #{tpu_custom_call.1} parent=1 // pred_fallthru
      _
    // Predicated region
    $region38: #{tpu_custom_call.1} parent=1 // pred_check
      _
    $region39: #{tpu_custom_call.1} parent=1 // pred_check_branch
      %78 = sbr.rel (0) target = $region41
    $region40: #{tpu_custom_call.1} parent=1 // pred_region
      %80 = dma.done [#allocation4], 256
    $region41: #{tpu_custom_call.1} parent=1 // pred_fallthru
      _
    // Predicated region
    $region42: #{tpu_custom_call.1} parent=1 // pred_check
      _
    $region43: #{tpu_custom_call.1} parent=1 // pred_check_branch
      %82 = sbr.rel (0) target = $region45
    $region44: #{tpu_custom_call.1} parent=1 // pred_region
      %84 = dma.done [#allocation7], 64
    $region45: #{tpu_custom_call.1} parent=1 // pred_fallthru
      _
    // Predicated region
    $region46: #{tpu_custom_call.1} parent=1 // pred_check
      _
    $region47: #{tpu_custom_call.1} parent=1 // pred_check_branch
      %86 = sbr.rel (0) target = $region49
    $region48: #{tpu_custom_call.1} parent=1 // pred_region
      %88 = dma.done [#allocation7], 8192
    $region49: #{tpu_custom_call.1} parent=1 // pred_fallthru
      _
    // Predicated region
    $region50: #{tpu_custom_call.1} parent=1 // pred_check
      _
    $region51: #{tpu_custom_call.1} parent=1 // pred_check_branch
      %90 = sbr.rel (0) target = $region53
    $region52: #{tpu_custom_call.1} parent=1 // pred_region
      %92 = dma.done [#allocation10], 2048
    $region53: #{tpu_custom_call.1} parent=1 // pred_fallthru
      _
    %v93 = vld [vmem:[#allocation3] sm:$0xff]
    %v94 = vld [vmem:[#allocation3 + $0x8] sm:$0xff]
    %97 = vst [vmem:[#allocation1] ss:$4 sm:$0xff] %v93
    %s98 = scalar_lea.vmem [#allocation1], 32
    %99 = vst [vmem:[%s98] ss:$4 sm:$0xff] %v94
    %v100 = vld.sshfl [vmem:[#allocation1] sm:$0xff pattern:$0x73625140]
    %v101 = vld.sshfl [vmem:[#allocation1 + $0x8] sm:$0xff pattern:$0x73625140]
    %v102 = vld.sshfl [vmem:[#allocation1 + $0x10] sm:$0xff pattern:$0x73625140]
    %v103 = vld.sshfl [vmem:[#allocation1 + $0x18] sm:$0xff pattern:$0x73625140]
    %v104 = vld.sshfl [vmem:[#allocation1 + $0x20] sm:$0xff pattern:$0x73625140]
    %v105 = vld.sshfl [vmem:[#allocation1 + $0x28] sm:$0xff pattern:$0x73625140]
    %v106 = vld.sshfl [vmem:[#allocation1 + $0x30] sm:$0xff pattern:$0x73625140]
    %v107 = vld.sshfl [vmem:[#allocation1 + $0x38] sm:$0xff pattern:$0x73625140]
    %v116 = vpack.c.bf16 %v100, %v100
    %v117 = vpack.c.bf16 %v101, %v101
    %v118 = vpack.c.bf16 %v102, %v102
    %v119 = vpack.c.bf16 %v103, %v103
    %v120 = vpack.c.bf16 %v104, %v104
    %v121 = vpack.c.bf16 %v105, %v105
    %v122 = vpack.c.bf16 %v106, %v106
    %v123 = vpack.c.bf16 %v107, %v107
    %v124 = vld [vmem:[#allocation6] sm:$0xf]
    %126 = vst [vmem:[#allocation1] ss:$4 sm:$0xff] %v124
    %v127 = vld.sshfl [vmem:[#allocation1] sm:$0xff pattern:$0x73625140]
    %v128 = vld.sshfl [vmem:[#allocation1 + $0x8] sm:$0xff pattern:$0x73625140]
    %v131 = vpack.c.bf16 %v127, %v127
    %v132 = vpack.c.bf16 %v128, %v128
    %v133 = vld [vmem:[#allocation8] sm:$0xf]
    %v134 = vld [vmem:[#allocation8 + $0x4] sm:$0xf]
    %v135 = vld [vmem:[#allocation8 + $0x8] sm:$0xf]
    %v136 = vld [vmem:[#allocation8 + $0xc] sm:$0xf]
    %v137 = vld [vmem:[#allocation8 + $0x10] sm:$0xf]
    %v138 = vld [vmem:[#allocation8 + $0x14] sm:$0xf]
    %v139 = vld [vmem:[#allocation8 + $0x18] sm:$0xf]
    %v140 = vld [vmem:[#allocation8 + $0x1c] sm:$0xf]
    %v141 = vld [vmem:[#allocation8 + $0x20] sm:$0xf]
    %v142 = vld [vmem:[#allocation8 + $0x24] sm:$0xf]
    %v143 = vld [vmem:[#allocation8 + $0x28] sm:$0xf]
    %v144 = vld [vmem:[#allocation8 + $0x2c] sm:$0xf]
    %v145 = vld [vmem:[#allocation8 + $0x30] sm:$0xf]
    %v146 = vld [vmem:[#allocation8 + $0x34] sm:$0xf]
    %v147 = vld [vmem:[#allocation8 + $0x38] sm:$0xf]
    %v148 = vld [vmem:[#allocation8 + $0x3c] sm:$0xf]
    %v149 = vld [vmem:[#allocation8 + $0x40] sm:$0xf]
    %v150 = vld [vmem:[#allocation8 + $0x44] sm:$0xf]
    %v151 = vld [vmem:[#allocation8 + $0x48] sm:$0xf]
    %v152 = vld [vmem:[#allocation8 + $0x4c] sm:$0xf]
    %v153 = vld [vmem:[#allocation8 + $0x50] sm:$0xf]
    %v154 = vld [vmem:[#allocation8 + $0x54] sm:$0xf]
    %v155 = vld [vmem:[#allocation8 + $0x58] sm:$0xf]
    %v156 = vld [vmem:[#allocation8 + $0x5c] sm:$0xf]
    %v157 = vld [vmem:[#allocation8 + $0x60] sm:$0xf]
    %v158 = vld [vmem:[#allocation8 + $0x64] sm:$0xf]
    %v159 = vld [vmem:[#allocation8 + $0x68] sm:$0xf]
    %v160 = vld [vmem:[#allocation8 + $0x6c] sm:$0xf]
    %v161 = vld [vmem:[#allocation8 + $0x70] sm:$0xf]
    %v162 = vld [vmem:[#allocation8 + $0x74] sm:$0xf]
    %v163 = vld [vmem:[#allocation8 + $0x78] sm:$0xf]
    %v164 = vld [vmem:[#allocation8 + $0x7c] sm:$0xf]
    %v165 = vld [vmem:[#allocation8 + $0x80] sm:$0xf]
    %v166 = vld [vmem:[#allocation8 + $0x84] sm:$0xf]
    %v167 = vld [vmem:[#allocation8 + $0x88] sm:$0xf]
    %v168 = vld [vmem:[#allocation8 + $0x8c] sm:$0xf]
    %v169 = vld [vmem:[#allocation8 + $0x90] sm:$0xf]
    %v170 = vld [vmem:[#allocation8 + $0x94] sm:$0xf]
    %v171 = vld [vmem:[#allocation8 + $0x98] sm:$0xf]
    %v172 = vld [vmem:[#allocation8 + $0x9c] sm:$0xf]
    %v173 = vld [vmem:[#allocation8 + $0xa0] sm:$0xf]
    %v174 = vld [vmem:[#allocation8 + $0xa4] sm:$0xf]
    %v175 = vld [vmem:[#allocation8 + $0xa8] sm:$0xf]
    %v176 = vld [vmem:[#allocation8 + $0xac] sm:$0xf]
    %v177 = vld [vmem:[#allocation8 + $0xb0] sm:$0xf]
    %v178 = vld [vmem:[#allocation8 + $0xb4] sm:$0xf]
    %v179 = vld [vmem:[#allocation8 + $0xb8] sm:$0xf]
    %v180 = vld [vmem:[#allocation8 + $0xbc] sm:$0xf]
    %v181 = vld [vmem:[#allocation8 + $0xc0] sm:$0xf]
    %v182 = vld [vmem:[#allocation8 + $0xc4] sm:$0xf]
    %v183 = vld [vmem:[#allocation8 + $0xc8] sm:$0xf]
    %v184 = vld [vmem:[#allocation8 + $0xcc] sm:$0xf]
    %v185 = vld [vmem:[#allocation8 + $0xd0] sm:$0xf]
    %v186 = vld [vmem:[#allocation8 + $0xd4] sm:$0xf]
    %v187 = vld [vmem:[#allocation8 + $0xd8] sm:$0xf]
    %v188 = vld [vmem:[#allocation8 + $0xdc] sm:$0xf]
    %v189 = vld [vmem:[#allocation8 + $0xe0] sm:$0xf]
    %v190 = vld [vmem:[#allocation8 + $0xe4] sm:$0xf]
    %v191 = vld [vmem:[#allocation8 + $0xe8] sm:$0xf]
    %v192 = vld [vmem:[#allocation8 + $0xec] sm:$0xf]
    %v193 = vld [vmem:[#allocation8 + $0xf0] sm:$0xf]
    %v194 = vld [vmem:[#allocation8 + $0xf4] sm:$0xf]
    %v195 = vld [vmem:[#allocation8 + $0xf8] sm:$0xf]
    %v196 = vld [vmem:[#allocation8 + $0xfc] sm:$0xf]
    %v197 = vld [vmem:[#allocation8 + $0x100] sm:$0xf]
    %v198 = vld [vmem:[#allocation8 + $0x104] sm:$0xf]
    %v199 = vld [vmem:[#allocation8 + $0x108] sm:$0xf]
    %v200 = vld [vmem:[#allocation8 + $0x10c] sm:$0xf]
    %v201 = vld [vmem:[#allocation8 + $0x110] sm:$0xf]
    %v202 = vld [vmem:[#allocation8 + $0x114] sm:$0xf]
    %v203 = vld [vmem:[#allocation8 + $0x118] sm:$0xf]
    %v204 = vld [vmem:[#allocation8 + $0x11c] sm:$0xf]
    %v205 = vld [vmem:[#allocation8 + $0x120] sm:$0xf]
    %v206 = vld [vmem:[#allocation8 + $0x124] sm:$0xf]
    %v207 = vld [vmem:[#allocation8 + $0x128] sm:$0xf]
    %v208 = vld [vmem:[#allocation8 + $0x12c] sm:$0xf]
    %v209 = vld [vmem:[#allocation8 + $0x130] sm:$0xf]
    %v210 = vld [vmem:[#allocation8 + $0x134] sm:$0xf]
    %v211 = vld [vmem:[#allocation8 + $0x138] sm:$0xf]
    %v212 = vld [vmem:[#allocation8 + $0x13c] sm:$0xf]
    %v213 = vld [vmem:[#allocation8 + $0x140] sm:$0xf]
    %v214 = vld [vmem:[#allocation8 + $0x144] sm:$0xf]
    %v215 = vld [vmem:[#allocation8 + $0x148] sm:$0xf]
    %v216 = vld [vmem:[#allocation8 + $0x14c] sm:$0xf]
    %v217 = vld [vmem:[#allocation8 + $0x150] sm:$0xf]
    %v218 = vld [vmem:[#allocation8 + $0x154] sm:$0xf]
    %v219 = vld [vmem:[#allocation8 + $0x158] sm:$0xf]
    %v220 = vld [vmem:[#allocation8 + $0x15c] sm:$0xf]
    %v221 = vld [vmem:[#allocation8 + $0x160] sm:$0xf]
    %v222 = vld [vmem:[#allocation8 + $0x164] sm:$0xf]
    %v223 = vld [vmem:[#allocation8 + $0x168] sm:$0xf]
    %v224 = vld [vmem:[#allocation8 + $0x16c] sm:$0xf]
    %v225 = vld [vmem:[#allocation8 + $0x170] sm:$0xf]
    %v226 = vld [vmem:[#allocation8 + $0x174] sm:$0xf]
    %v227 = vld [vmem:[#allocation8 + $0x178] sm:$0xf]
    %v228 = vld [vmem:[#allocation8 + $0x17c] sm:$0xf]
    %v229 = vld [vmem:[#allocation8 + $0x180] sm:$0xf]
    %v230 = vld [vmem:[#allocation8 + $0x184] sm:$0xf]
    %v231 = vld [vmem:[#allocation8 + $0x188] sm:$0xf]
    %v232 = vld [vmem:[#allocation8 + $0x18c] sm:$0xf]
    %v233 = vld [vmem:[#allocation8 + $0x190] sm:$0xf]
    %v234 = vld [vmem:[#allocation8 + $0x194] sm:$0xf]
    %v235 = vld [vmem:[#allocation8 + $0x198] sm:$0xf]
    %v236 = vld [vmem:[#allocation8 + $0x19c] sm:$0xf]
    %v237 = vld [vmem:[#allocation8 + $0x1a0] sm:$0xf]
    %v238 = vld [vmem:[#allocation8 + $0x1a4] sm:$0xf]
    %v239 = vld [vmem:[#allocation8 + $0x1a8] sm:$0xf]
    %v240 = vld [vmem:[#allocation8 + $0x1ac] sm:$0xf]
    %v241 = vld [vmem:[#allocation8 + $0x1b0] sm:$0xf]
    %v242 = vld [vmem:[#allocation8 + $0x1b4] sm:$0xf]
    %v243 = vld [vmem:[#allocation8 + $0x1b8] sm:$0xf]
    %v244 = vld [vmem:[#allocation8 + $0x1bc] sm:$0xf]
    %v245 = vld [vmem:[#allocation8 + $0x1c0] sm:$0xf]
    %v246 = vld [vmem:[#allocation8 + $0x1c4] sm:$0xf]
    %v247 = vld [vmem:[#allocation8 + $0x1c8] sm:$0xf]
    %v248 = vld [vmem:[#allocation8 + $0x1cc] sm:$0xf]
    %v249 = vld [vmem:[#allocation8 + $0x1d0] sm:$0xf]
    %v250 = vld [vmem:[#allocation8 + $0x1d4] sm:$0xf]
    %v251 = vld [vmem:[#allocation8 + $0x1d8] sm:$0xf]
    %v252 = vld [vmem:[#allocation8 + $0x1dc] sm:$0xf]
    %v253 = vld [vmem:[#allocation8 + $0x1e0] sm:$0xf]
    %v254 = vld [vmem:[#allocation8 + $0x1e4] sm:$0xf]
    %v255 = vld [vmem:[#allocation8 + $0x1e8] sm:$0xf]
    %v256 = vld [vmem:[#allocation8 + $0x1ec] sm:$0xf]
    %v257 = vld [vmem:[#allocation8 + $0x1f0] sm:$0xf]
    %v258 = vld [vmem:[#allocation8 + $0x1f4] sm:$0xf]
    %v259 = vld [vmem:[#allocation8 + $0x1f8] sm:$0xf]
    %v260 = vld [vmem:[#allocation8 + $0x1fc] sm:$0xf]
    %v261 = vld [vmem:[%s3] sm:$0x1]
    %v263 = vperm.slane %v261, 0
    %v393 = vunpack.c.l.b16 %v133
    %v394 = vunpack.c.l.b16 %v134
    %v395 = vunpack.c.l.b16 %v135
    %v396 = vunpack.c.l.b16 %v136
    %v397 = vunpack.c.l.b16 %v137
    %v398 = vunpack.c.l.b16 %v138
    %v399 = vunpack.c.l.b16 %v139
    %v400 = vunpack.c.l.b16 %v140
    %v401 = vunpack.c.l.b16 %v141
    %v402 = vunpack.c.l.b16 %v142
    %v403 = vunpack.c.l.b16 %v143
    %v404 = vunpack.c.l.b16 %v144
    %v405 = vunpack.c.l.b16 %v145
    %v406 = vunpack.c.l.b16 %v146
    %v407 = vunpack.c.l.b16 %v147
    %v408 = vunpack.c.l.b16 %v148
    %v409 = vunpack.c.l.b16 %v149
    %v410 = vunpack.c.l.b16 %v150
    %v411 = vunpack.c.l.b16 %v151
    %v412 = vunpack.c.l.b16 %v152
    %v413 = vunpack.c.l.b16 %v153
    %v414 = vunpack.c.l.b16 %v154
    %v415 = vunpack.c.l.b16 %v155
    %v416 = vunpack.c.l.b16 %v156
    %v417 = vunpack.c.l.b16 %v157
    %v418 = vunpack.c.l.b16 %v158
    %v419 = vunpack.c.l.b16 %v159
    %v420 = vunpack.c.l.b16 %v160
    %v421 = vunpack.c.l.b16 %v161
    %v422 = vunpack.c.l.b16 %v162
    %v423 = vunpack.c.l.b16 %v163
    %v424 = vunpack.c.l.b16 %v164
    %v425 = vunpack.c.l.b16 %v165
    %v426 = vunpack.c.l.b16 %v166
    %v427 = vunpack.c.l.b16 %v167
    %v428 = vunpack.c.l.b16 %v168
    %v429 = vunpack.c.l.b16 %v169
    %v430 = vunpack.c.l.b16 %v170
    %v431 = vunpack.c.l.b16 %v171
    %v432 = vunpack.c.l.b16 %v172
    %v433 = vunpack.c.l.b16 %v173
    %v434 = vunpack.c.l.b16 %v174
    %v435 = vunpack.c.l.b16 %v175
    %v436 = vunpack.c.l.b16 %v176
    %v437 = vunpack.c.l.b16 %v177
    %v438 = vunpack.c.l.b16 %v178
    %v439 = vunpack.c.l.b16 %v179
    %v440 = vunpack.c.l.b16 %v180
    %v441 = vunpack.c.l.b16 %v181
    %v442 = vunpack.c.l.b16 %v182
    %v443 = vunpack.c.l.b16 %v183
    %v444 = vunpack.c.l.b16 %v184
    %v445 = vunpack.c.l.b16 %v185
    %v446 = vunpack.c.l.b16 %v186
    %v447 = vunpack.c.l.b16 %v187
    %v448 = vunpack.c.l.b16 %v188
    %v449 = vunpack.c.l.b16 %v189
    %v450 = vunpack.c.l.b16 %v190
    %v451 = vunpack.c.l.b16 %v191
    %v452 = vunpack.c.l.b16 %v192
    %v453 = vunpack.c.l.b16 %v193
    %v454 = vunpack.c.l.b16 %v194
    %v455 = vunpack.c.l.b16 %v195
    %v456 = vunpack.c.l.b16 %v196
    %v457 = vunpack.c.l.b16 %v197
    %v458 = vunpack.c.l.b16 %v198
    %v459 = vunpack.c.l.b16 %v199
    %v460 = vunpack.c.l.b16 %v200
    %v461 = vunpack.c.l.b16 %v201
    %v462 = vunpack.c.l.b16 %v202
    %v463 = vunpack.c.l.b16 %v203
    %v464 = vunpack.c.l.b16 %v204
    %v465 = vunpack.c.l.b16 %v205
    %v466 = vunpack.c.l.b16 %v206
    %v467 = vunpack.c.l.b16 %v207
    %v468 = vunpack.c.l.b16 %v208
    %v469 = vunpack.c.l.b16 %v209
    %v470 = vunpack.c.l.b16 %v210
    %v471 = vunpack.c.l.b16 %v211
    %v472 = vunpack.c.l.b16 %v212
    %v473 = vunpack.c.l.b16 %v213
    %v474 = vunpack.c.l.b16 %v214
    %v475 = vunpack.c.l.b16 %v215
    %v476 = vunpack.c.l.b16 %v216
    %v477 = vunpack.c.l.b16 %v217
    %v478 = vunpack.c.l.b16 %v218
    %v479 = vunpack.c.l.b16 %v219
    %v480 = vunpack.c.l.b16 %v220
    %v481 = vunpack.c.l.b16 %v221
    %v482 = vunpack.c.l.b16 %v222
    %v483 = vunpack.c.l.b16 %v223
    %v484 = vunpack.c.l.b16 %v224
    %v485 = vunpack.c.l.b16 %v225
    %v486 = vunpack.c.l.b16 %v226
    %v487 = vunpack.c.l.b16 %v227
    %v488 = vunpack.c.l.b16 %v228
    %v489 = vunpack.c.l.b16 %v229
    %v490 = vunpack.c.l.b16 %v230
    %v491 = vunpack.c.l.b16 %v231
    %v492 = vunpack.c.l.b16 %v232
    %v493 = vunpack.c.l.b16 %v233
    %v494 = vunpack.c.l.b16 %v234
    %v495 = vunpack.c.l.b16 %v235
    %v496 = vunpack.c.l.b16 %v236
    %v497 = vunpack.c.l.b16 %v237
    %v498 = vunpack.c.l.b16 %v238
    %v499 = vunpack.c.l.b16 %v239
    %v500 = vunpack.c.l.b16 %v240
    %v501 = vunpack.c.l.b16 %v241
    %v502 = vunpack.c.l.b16 %v242
    %v503 = vunpack.c.l.b16 %v243
    %v504 = vunpack.c.l.b16 %v244
    %v505 = vunpack.c.l.b16 %v245
    %v506 = vunpack.c.l.b16 %v246
    %v507 = vunpack.c.l.b16 %v247
    %v508 = vunpack.c.l.b16 %v248
    %v509 = vunpack.c.l.b16 %v249
    %v510 = vunpack.c.l.b16 %v250
    %v511 = vunpack.c.l.b16 %v251
    %v512 = vunpack.c.l.b16 %v252
    %v513 = vunpack.c.l.b16 %v253
    %v514 = vunpack.c.l.b16 %v254
    %v515 = vunpack.c.l.b16 %v255
    %v516 = vunpack.c.l.b16 %v256
    %v517 = vunpack.c.l.b16 %v257
    %v518 = vunpack.c.l.b16 %v258
    %v519 = vunpack.c.l.b16 %v259
    %v520 = vunpack.c.l.b16 %v260
    %v521 = vpack.c.b16 %v394, %v393
    %v522 = vpack.c.b16 %v396, %v395
    %v523 = vpack.c.b16 %v398, %v397
    %v524 = vpack.c.b16 %v400, %v399
    %v525 = vpack.c.b16 %v402, %v401
    %v526 = vpack.c.b16 %v404, %v403
    %v527 = vpack.c.b16 %v406, %v405
    %v528 = vpack.c.b16 %v408, %v407
    %v529 = vpack.c.b16 %v410, %v409
    %v530 = vpack.c.b16 %v412, %v411
    %v531 = vpack.c.b16 %v414, %v413
    %v532 = vpack.c.b16 %v416, %v415
    %v533 = vpack.c.b16 %v418, %v417
    %v534 = vpack.c.b16 %v420, %v419
    %v535 = vpack.c.b16 %v422, %v421
    %v536 = vpack.c.b16 %v424, %v423
    %v537 = vpack.c.b16 %v426, %v425
    %v538 = vpack.c.b16 %v428, %v427
    %v539 = vpack.c.b16 %v430, %v429
    %v540 = vpack.c.b16 %v432, %v431
    %v541 = vpack.c.b16 %v434, %v433
    %v542 = vpack.c.b16 %v436, %v435
    %v543 = vpack.c.b16 %v438, %v437
    %v544 = vpack.c.b16 %v440, %v439
    %v545 = vpack.c.b16 %v442, %v441
    %v546 = vpack.c.b16 %v444, %v443
    %v547 = vpack.c.b16 %v446, %v445
    %v548 = vpack.c.b16 %v448, %v447
    %v549 = vpack.c.b16 %v450, %v449
    %v550 = vpack.c.b16 %v452, %v451
    %v551 = vpack.c.b16 %v454, %v453
    %v552 = vpack.c.b16 %v456, %v455
    %v553 = vpack.c.b16 %v458, %v457
    %v554 = vpack.c.b16 %v460, %v459
    %v555 = vpack.c.b16 %v462, %v461
    %v556 = vpack.c.b16 %v464, %v463
    %v557 = vpack.c.b16 %v466, %v465
    %v558 = vpack.c.b16 %v468, %v467
    %v559 = vpack.c.b16 %v470, %v469
    %v560 = vpack.c.b16 %v472, %v471
    %v561 = vpack.c.b16 %v474, %v473
    %v562 = vpack.c.b16 %v476, %v475
    %v563 = vpack.c.b16 %v478, %v477
    %v564 = vpack.c.b16 %v480, %v479
    %v565 = vpack.c.b16 %v482, %v481
    %v566 = vpack.c.b16 %v484, %v483
    %v567 = vpack.c.b16 %v486, %v485
    %v568 = vpack.c.b16 %v488, %v487
    %v569 = vpack.c.b16 %v490, %v489
    %v570 = vpack.c.b16 %v492, %v491
    %v571 = vpack.c.b16 %v494, %v493
    %v572 = vpack.c.b16 %v496, %v495
    %v573 = vpack.c.b16 %v498, %v497
    %v574 = vpack.c.b16 %v500, %v499
    %v575 = vpack.c.b16 %v502, %v501
    %v576 = vpack.c.b16 %v504, %v503
    %v577 = vpack.c.b16 %v506, %v505
    %v578 = vpack.c.b16 %v508, %v507
    %v579 = vpack.c.b16 %v510, %v509
    %v580 = vpack.c.b16 %v512, %v511
    %v581 = vpack.c.b16 %v514, %v513
    %v582 = vpack.c.b16 %v516, %v515
    %v583 = vpack.c.b16 %v518, %v517
    %v584 = vpack.c.b16 %v520, %v519
    %649 = vmatpush.bf16.msra.mxu0 %v528
    %650 = vmatpush.bf16.msra.mxu0 %v527
    %651 = vmatpush.bf16.msra.mxu0 %v526
    %652 = vmatpush.bf16.msra.mxu0 %v525
    %653 = vmatpush.bf16.msra.mxu0 %v524
    %654 = vmatpush.bf16.msra.mxu0 %v523
    %655 = vmatpush.bf16.msra.mxu0 %v522
    %656 = vmatpush.bf16.msra.mxu0 %v521
    %657 = vmatmul.bf16.gmra.mxu0 %v116
    %v658 = vpop.f32.mrf.mxu0
    %v659 = vadd.f32 %v263, %v658
    %v660 = vpop.f32.mrf.mxu0
    %661 = vdwg.mxu0
    %662 = vmatpush.bf16.msra.mxu0 %v536
    %663 = vmatpush.bf16.msra.mxu0 %v535
    %664 = vmatpush.bf16.msra.mxu0 %v534
    %665 = vmatpush.bf16.msra.mxu0 %v533
    %666 = vmatpush.bf16.msra.mxu0 %v532
    %667 = vmatpush.bf16.msra.mxu0 %v531
    %668 = vmatpush.bf16.msra.mxu0 %v530
    %669 = vmatpush.bf16.msra.mxu0 %v529
    %670 = vmatmul.bf16.gmra.mxu0 %v117
    %v671 = vpop.f32.mrf.mxu0
    %v672 = vadd.f32 %v659, %v671
    %v673 = vpop.f32.mrf.mxu0
    %674 = vdwg.mxu0
    %675 = vmatpush.bf16.msra.mxu0 %v544
    %676 = vmatpush.bf16.msra.mxu0 %v543
    %677 = vmatpush.bf16.msra.mxu0 %v542
    %678 = vmatpush.bf16.msra.mxu0 %v541
    %679 = vmatpush.bf16.msra.mxu0 %v540
    %680 = vmatpush.bf16.msra.mxu0 %v539
    %681 = vmatpush.bf16.msra.mxu0 %v538
    %682 = vmatpush.bf16.msra.mxu0 %v537
    %683 = vmatmul.bf16.gmra.mxu0 %v118
    %v684 = vpop.f32.mrf.mxu0
    %v685 = vadd.f32 %v672, %v684
    %v686 = vpop.f32.mrf.mxu0
    %687 = vdwg.mxu0
    %688 = vmatpush.bf16.msra.mxu0 %v552
    %689 = vmatpush.bf16.msra.mxu0 %v551
    %690 = vmatpush.bf16.msra.mxu0 %v550
    %691 = vmatpush.bf16.msra.mxu0 %v549
    %692 = vmatpush.bf16.msra.mxu0 %v548
    %693 = vmatpush.bf16.msra.mxu0 %v547
    %694 = vmatpush.bf16.msra.mxu0 %v546
    %695 = vmatpush.bf16.msra.mxu0 %v545
    %696 = vmatmul.bf16.gmra.mxu0 %v119
    %v697 = vpop.f32.mrf.mxu0
    %v698 = vadd.f32 %v685, %v697
    %v699 = vpop.f32.mrf.mxu0
    %700 = vdwg.mxu0
    %701 = vmatpush.bf16.msra.mxu0 %v560
    %702 = vmatpush.bf16.msra.mxu0 %v559
    %703 = vmatpush.bf16.msra.mxu0 %v558
    %704 = vmatpush.bf16.msra.mxu0 %v557
    %705 = vmatpush.bf16.msra.mxu0 %v556
    %706 = vmatpush.bf16.msra.mxu0 %v555
    %707 = vmatpush.bf16.msra.mxu0 %v554
    %708 = vmatpush.bf16.msra.mxu0 %v553
    %709 = vmatmul.bf16.gmra.mxu0 %v120
    %v710 = vpop.f32.mrf.mxu0
    %v711 = vadd.f32 %v698, %v710
    %v712 = vpop.f32.mrf.mxu0
    %713 = vdwg.mxu0
    %714 = vmatpush.bf16.msra.mxu0 %v568
    %715 = vmatpush.bf16.msra.mxu0 %v567
    %716 = vmatpush.bf16.msra.mxu0 %v566
    %717 = vmatpush.bf16.msra.mxu0 %v565
    %718 = vmatpush.bf16.msra.mxu0 %v564
    %719 = vmatpush.bf16.msra.mxu0 %v563
    %720 = vmatpush.bf16.msra.mxu0 %v562
    %721 = vmatpush.bf16.msra.mxu0 %v561
    %722 = vmatmul.bf16.gmra.mxu0 %v121
    %v723 = vpop.f32.mrf.mxu0
    %v724 = vadd.f32 %v711, %v723
    %v725 = vpop.f32.mrf.mxu0
    %726 = vdwg.mxu0
    %727 = vmatpush.bf16.msra.mxu0 %v576
    %728 = vmatpush.bf16.msra.mxu0 %v575
    %729 = vmatpush.bf16.msra.mxu0 %v574
    %730 = vmatpush.bf16.msra.mxu0 %v573
    %731 = vmatpush.bf16.msra.mxu0 %v572
    %732 = vmatpush.bf16.msra.mxu0 %v571
    %733 = vmatpush.bf16.msra.mxu0 %v570
    %734 = vmatpush.bf16.msra.mxu0 %v569
    %735 = vmatmul.bf16.gmra.mxu0 %v122
    %v736 = vpop.f32.mrf.mxu0
    %v737 = vadd.f32 %v724, %v736
    %v738 = vpop.f32.mrf.mxu0
    %739 = vdwg.mxu0
    %740 = vmatpush.bf16.msra.mxu0 %v584
    %741 = vmatpush.bf16.msra.mxu0 %v583
    %742 = vmatpush.bf16.msra.mxu0 %v582
    %743 = vmatpush.bf16.msra.mxu0 %v581
    %744 = vmatpush.bf16.msra.mxu0 %v580
    %745 = vmatpush.bf16.msra.mxu0 %v579
    %746 = vmatpush.bf16.msra.mxu0 %v578
    %747 = vmatpush.bf16.msra.mxu0 %v577
    %748 = vmatmul.bf16.gmra.mxu0 %v123
    %v749 = vpop.f32.mrf.mxu0
    %v750 = vadd.f32 %v737, %v749
    %v751 = vpop.f32.mrf.mxu0
    %752 = vdwg.mxu0
    %v753 = vld [vmem:[#allocation9] sm:$0xf]
    %v754 = vld [vmem:[#allocation9 + $0x4] sm:$0xf]
    %v755 = vld [vmem:[#allocation9 + $0x8] sm:$0xf]
    %v756 = vld [vmem:[#allocation9 + $0xc] sm:$0xf]
    %v757 = vld [vmem:[#allocation9 + $0x10] sm:$0xf]
    %v758 = vld [vmem:[#allocation9 + $0x14] sm:$0xf]
    %v759 = vld [vmem:[#allocation9 + $0x18] sm:$0xf]
    %v760 = vld [vmem:[#allocation9 + $0x1c] sm:$0xf]
    %v761 = vld [vmem:[#allocation9 + $0x20] sm:$0xf]
    %v762 = vld [vmem:[#allocation9 + $0x24] sm:$0xf]
    %v763 = vld [vmem:[#allocation9 + $0x28] sm:$0xf]
    %v764 = vld [vmem:[#allocation9 + $0x2c] sm:$0xf]
    %v765 = vld [vmem:[#allocation9 + $0x30] sm:$0xf]
    %v766 = vld [vmem:[#allocation9 + $0x34] sm:$0xf]
    %v767 = vld [vmem:[#allocation9 + $0x38] sm:$0xf]
    %v768 = vld [vmem:[#allocation9 + $0x3c] sm:$0xf]
    %v769 = vld [vmem:[#allocation9 + $0x40] sm:$0xf]
    %v770 = vld [vmem:[#allocation9 + $0x44] sm:$0xf]
    %v771 = vld [vmem:[#allocation9 + $0x48] sm:$0xf]
    %v772 = vld [vmem:[#allocation9 + $0x4c] sm:$0xf]
    %v773 = vld [vmem:[#allocation9 + $0x50] sm:$0xf]
    %v774 = vld [vmem:[#allocation9 + $0x54] sm:$0xf]
    %v775 = vld [vmem:[#allocation9 + $0x58] sm:$0xf]
    %v776 = vld [vmem:[#allocation9 + $0x5c] sm:$0xf]
    %v777 = vld [vmem:[#allocation9 + $0x60] sm:$0xf]
    %v778 = vld [vmem:[#allocation9 + $0x64] sm:$0xf]
    %v779 = vld [vmem:[#allocation9 + $0x68] sm:$0xf]
    %v780 = vld [vmem:[#allocation9 + $0x6c] sm:$0xf]
    %v781 = vld [vmem:[#allocation9 + $0x70] sm:$0xf]
    %v782 = vld [vmem:[#allocation9 + $0x74] sm:$0xf]
    %v783 = vld [vmem:[#allocation9 + $0x78] sm:$0xf]
    %v784 = vld [vmem:[#allocation9 + $0x7c] sm:$0xf]
    %v785 = vld [vmem:[%s5] sm:$0x1]
    %v787 = vperm.slane %v785, 0
    %v821 = vunpack.c.l.b16 %v753
    %v822 = vunpack.c.l.b16 %v754
    %v823 = vunpack.c.l.b16 %v755
    %v824 = vunpack.c.l.b16 %v756
    %v825 = vunpack.c.l.b16 %v757
    %v826 = vunpack.c.l.b16 %v758
    %v827 = vunpack.c.l.b16 %v759
    %v828 = vunpack.c.l.b16 %v760
    %v829 = vunpack.c.l.b16 %v761
    %v830 = vunpack.c.l.b16 %v762
    %v831 = vunpack.c.l.b16 %v763
    %v832 = vunpack.c.l.b16 %v764
    %v833 = vunpack.c.l.b16 %v765
    %v834 = vunpack.c.l.b16 %v766
    %v835 = vunpack.c.l.b16 %v767
    %v836 = vunpack.c.l.b16 %v768
    %v837 = vunpack.c.l.b16 %v769
    %v838 = vunpack.c.l.b16 %v770
    %v839 = vunpack.c.l.b16 %v771
    %v840 = vunpack.c.l.b16 %v772
    %v841 = vunpack.c.l.b16 %v773
    %v842 = vunpack.c.l.b16 %v774
    %v843 = vunpack.c.l.b16 %v775
    %v844 = vunpack.c.l.b16 %v776
    %v845 = vunpack.c.l.b16 %v777
    %v846 = vunpack.c.l.b16 %v778
    %v847 = vunpack.c.l.b16 %v779
    %v848 = vunpack.c.l.b16 %v780
    %v849 = vunpack.c.l.b16 %v781
    %v850 = vunpack.c.l.b16 %v782
    %v851 = vunpack.c.l.b16 %v783
    %v852 = vunpack.c.l.b16 %v784
    %v853 = vpack.c.b16 %v822, %v821
    %v854 = vpack.c.b16 %v824, %v823
    %v855 = vpack.c.b16 %v826, %v825
    %v856 = vpack.c.b16 %v828, %v827
    %v857 = vpack.c.b16 %v830, %v829
    %v858 = vpack.c.b16 %v832, %v831
    %v859 = vpack.c.b16 %v834, %v833
    %v860 = vpack.c.b16 %v836, %v835
    %v861 = vpack.c.b16 %v838, %v837
    %v862 = vpack.c.b16 %v840, %v839
    %v863 = vpack.c.b16 %v842, %v841
    %v864 = vpack.c.b16 %v844, %v843
    %v865 = vpack.c.b16 %v846, %v845
    %v866 = vpack.c.b16 %v848, %v847
    %v867 = vpack.c.b16 %v850, %v849
    %v868 = vpack.c.b16 %v852, %v851
    %885 = vmatpush.bf16.msra.mxu0 %v860
    %886 = vmatpush.bf16.msra.mxu0 %v859
    %887 = vmatpush.bf16.msra.mxu0 %v858
    %888 = vmatpush.bf16.msra.mxu0 %v857
    %889 = vmatpush.bf16.msra.mxu0 %v856
    %890 = vmatpush.bf16.msra.mxu0 %v855
    %891 = vmatpush.bf16.msra.mxu0 %v854
    %892 = vmatpush.bf16.msra.mxu0 %v853
    %893 = vmatmul.bf16.gmra.mxu0 %v131
    %v894 = vpop.f32.mrf.mxu0
    %v895 = vadd.f32 %v787, %v894
    %v896 = vpop.f32.mrf.mxu0
    %897 = vdwg.mxu0
    %898 = vmatpush.bf16.msra.mxu0 %v868
    %899 = vmatpush.bf16.msra.mxu0 %v867
    %900 = vmatpush.bf16.msra.mxu0 %v866
    %901 = vmatpush.bf16.msra.mxu0 %v865
    %902 = vmatpush.bf16.msra.mxu0 %v864
    %903 = vmatpush.bf16.msra.mxu0 %v863
    %904 = vmatpush.bf16.msra.mxu0 %v862
    %905 = vmatpush.bf16.msra.mxu0 %v861
    %906 = vmatmul.bf16.gmra.mxu0 %v132
    %v907 = vpop.f32.mrf.mxu0
    %v908 = vadd.f32 %v895, %v907
    %v909 = vpop.f32.mrf.mxu0
    %910 = vdwg.mxu0
    %v911 = vmax.f32 %v750, 0.0
    %v912 = vmax.f32 %v908, 0.0
    %v913 = vld [vmem:[%s6] sm:$0x1]
    %v915 = vperm.slane %v913, 0
    %v917 = vmul.f32 %v911, %v915
    %v918 = vld [vmem:[%s7] sm:$0x1]
    %v920 = vperm.slane %v918, 0
    %v922 = vmul.f32 %v912, %v920
    %v923 = vadd.f32 %v917, %v922
    %vm924 = vcmask 1041408
    %v925 = vsel %vm924, %v923, 0.0
    %926 = vadd.xlane.f32.xlu0 %v925
    %v927 = vpop.xlane.xlu0 %926
    %s928 = sld [smem:[#allocation2]]
    %v929 = vstv %s928
    %v930 = vadd.f32 %v927, %v929
    %931 = vst [vmem:[#allocation11] sm:$0x3] %v930
    // Predicated region
    $region54: #{tpu_custom_call.1} parent=1 // pred_check
      _
    $region55: #{tpu_custom_call.1} parent=1 // pred_check_branch
      %933 = sbr.rel (0) target = $region57
    $region56: #{tpu_custom_call.1} parent=1 // pred_region
      %935 = vsyncadd [#allocation5], 0
      %s937 = sshll.u32 [#allocation11], 4
      %s938 = int_to_ptr.vmem [resolvable:$true] %s937
      %s939 = sshll.u32 %s9, 4
      %s940 = int_to_ptr.hbm [resolvable:$true] %s939
      %942 = dma.vmem_to_hbm [thread:$0]  %s938, 32, %s940, [#allocation5]
    $region57: #{tpu_custom_call.1} parent=1 // pred_fallthru
      _
    // Predicated region
    $region58: #{tpu_custom_call.1} parent=1 // pred_check
      _
    $region59: #{tpu_custom_call.1} parent=1 // pred_check_branch
      %944 = sbr.rel (0) target = $region61
    $region60: #{tpu_custom_call.1} parent=1 // pred_region
      %946 = dma.done [#allocation5], 32
    $region61: #{tpu_custom_call.1} parent=1 // pred_fallthru
      _
    %947 = vsyncpa [#allocation4], 1
    %948 = vsyncpa [#allocation7], 1
    %949 = vsyncpa [#allocation10], 1
    %950 = vsyncpa [#allocation5], 1

</llo_original>
